<compile_context>
chip_gen: v7x
topology: tpu7x:2x2x1
jax: 0.10.0
libtpu: 0.0.40
codegen_flags: <defaults>
</compile_context>

<pallas_src>
import jax
import jax.numpy as jnp
from jax import lax
from jax.experimental import pallas as pl
from jax.experimental.pallas import tpu as pltpu

EPS = 1e-5                      # PyTorch BatchNorm1d default eps
VMEM_LIMIT = 32 * 1024 * 1024   # explicit scoped-VMEM budget (safe on v5e/v6e/v7x)


def _round_up(x, m):
    return (x + m - 1) // m * m


def _bn_fold(bn, c):
    """(gamma, beta, mean, var) -> (scale, shift) so BN(y) = y*scale + shift."""
    gamma, beta, mean, var = bn
    inv = lax.rsqrt(var + EPS)
    scale = gamma * inv
    shift = beta - mean * scale
    return scale.reshape(*c), shift.reshape(*c)


# ---------------------------------------------------------------------------
# Kernel 1: Conv1d (im2col matmul) -> MaxPool1d(2) -> BatchNorm1d(eval) -> ReLU
#           gridded over output rows (batch*pooled_length)
# ---------------------------------------------------------------------------
def _conv_pool_bn_relu_kernel(pe_ref, po_ref, w_ref, b_ref, scale_ref, shift_ref, o_ref):
    w = w_ref[...]                                                     # (C*K, C_out) bf16
    ye = jnp.dot(pe_ref[...], w, preferred_element_type=jnp.float32)   # even positions
    yo = jnp.dot(po_ref[...], w, preferred_element_type=jnp.float32)   # odd positions
    y = jnp.maximum(ye, yo) + b_ref[...]       # maxpool(2) + per-channel conv bias
    y = y * scale_ref[...] + shift_ref[...]    # folded BatchNorm (eval mode)
    # TODO(synk): Dropout(p=0.6) is eval-mode identity (training needs an RNG mask).
    o_ref[...] = jnp.maximum(y, 0.0)           # ReLU


def conv_pool_bn_relu(x, weight, bias, bn, *, ksize, stride, pad, pool, tile_m=256):
    """x: (B, C_in, L) -> (B, L_pool, C_out)."""
    assert pool == 2, "only MaxPool1d(2) (non-overlapping pairs) is supported"
    B, C, L = x.shape
    C_out = weight.shape[0]
    CK = C * ksize

    # im2col in plain JAX (layout plumbing).
    # TODO(synk): a strided in-kernel gather (manual DMA) would avoid the ~K/stride x
    # activation blow-up in HBM; kept im2col for simplicity here.
    xp = jnp.pad(x, ((0, 0), (0, 0), (pad, pad)))
    L_out = (L + 2 * pad - ksize) // stride + 1
    idx = jnp.arange(L_out)[:, None] * stride + jnp.arange(ksize)[None, :]
    patches = xp[:, :, idx]                                   # (B, C, L_out, K)
    patches = jnp.transpose(patches, (0, 2, 1, 3)).reshape(B, L_out, CK)

    L_pool = L_out // pool
    pe = patches[:, 0:pool * L_pool:pool, :].reshape(B * L_pool, CK)
    po = patches[:, 1:pool * L_pool:pool, :].reshape(B * L_pool, CK)

    M = B * L_pool
    tile_m = min(tile_m, _round_up(M, 8))
    M_pad = _round_up(M, tile_m)
    pe = jnp.pad(pe, ((0, M_pad - M), (0, 0))).astype(jnp.bfloat16)   # bf16 MXU operands
    po = jnp.pad(po, ((0, M_pad - M), (0, 0))).astype(jnp.bfloat16)
    w2d = weight.reshape(C_out, CK).T.astype(jnp.bfloat16)            # (C*K, C_out)
    scale, shift = _bn_fold(bn, (1, C_out))

    cost = pl.CostEstimate(
        flops=4 * M_pad * CK * C_out, transcendentals=0,
        bytes_accessed=2 * 2 * M_pad * CK + 2 * CK * C_out + 4 * M_pad * C_out)

    out = pl.pallas_call(
        _conv_pool_bn_relu_kernel,
        out_shape=jax.ShapeDtypeStruct((M_pad, C_out), jnp.float32),
        grid_spec=pltpu.PrefetchScalarGridSpec(
            num_scalar_prefetch=0, grid=(M_pad // tile_m,),
            in_specs=[pl.BlockSpec((tile_m, CK), lambda i: (i, 0)),
                      pl.BlockSpec((tile_m, CK), lambda i: (i, 0)),
                      pl.BlockSpec((CK, C_out), lambda i: (0, 0)),   # resident weight
                      pl.BlockSpec((1, C_out), lambda i: (0, 0)),    # conv bias
                      pl.BlockSpec((1, C_out), lambda i: (0, 0)),    # BN scale
                      pl.BlockSpec((1, C_out), lambda i: (0, 0))],   # BN shift
            out_specs=pl.BlockSpec((tile_m, C_out), lambda i: (i, 0))),
        compiler_params=pltpu.CompilerParams(
            dimension_semantics=("parallel",), vmem_limit_bytes=VMEM_LIMIT),
        cost_estimate=cost,
    )(pe, po, w2d, bias.reshape(1, C_out), scale, shift)
    return out[:M].reshape(B, L_pool, C_out)


# ---------------------------------------------------------------------------
# Kernel 2a: gridded matmul+bias (hoisted LSTM input projection x @ Wih + b)
# ---------------------------------------------------------------------------
def _matmul_bias_kernel(x_ref, w_ref, b_ref, o_ref):
    o_ref[...] = (jnp.dot(x_ref[...], w_ref[...], preferred_element_type=jnp.float32)
                  + b_ref[...])


def matmul_bias(x, w, b, *, tile_m=256):
    """x: (M, F) @ w: (F, O) + b: (1, O) -> (M, O) f32."""
    M, F = x.shape
    O = w.shape[1]
    tile_m = min(tile_m, _round_up(M, 8))
    M_pad = _round_up(M, tile_m)
    xp = jnp.pad(x, ((0, M_pad - M), (0, 0))).astype(jnp.bfloat16)

    cost = pl.CostEstimate(
        flops=2 * M_pad * F * O, transcendentals=0,
        bytes_accessed=2 * M_pad * F + 2 * F * O + 4 * M_pad * O)

    out = pl.pallas_call(
        _matmul_bias_kernel,
        out_shape=jax.ShapeDtypeStruct((M_pad, O), jnp.float32),
        grid_spec=pltpu.PrefetchScalarGridSpec(
            num_scalar_prefetch=0, grid=(M_pad // tile_m,),
            in_specs=[pl.BlockSpec((tile_m, F), lambda i: (i, 0)),
                      pl.BlockSpec((F, O), lambda i: (0, 0)),
                      pl.BlockSpec((1, O), lambda i: (0, 0))],
            out_specs=pl.BlockSpec((tile_m, O), lambda i: (i, 0))),
        compiler_params=pltpu.CompilerParams(
            dimension_semantics=("parallel",), vmem_limit_bytes=VMEM_LIMIT),
        cost_estimate=cost,
    )(xp, w.astype(jnp.bfloat16), b)
    return out[:M]


# ---------------------------------------------------------------------------
# Kernel 2b: LSTM recurrence. Grid over time ("arbitrary"), h/c carried in VMEM
#            scratch; per step a single (N,H)x(H,4H) bf16 matmul + gate activations.
#            PyTorch gate order i, f, g, o along the packed 4H axis.
# ---------------------------------------------------------------------------
def _lstm_step_kernel(xw_ref, whh_ref, ys_ref, h_ref, c_ref):
    t = pl.program_id(0)

    @pl.when(t == 0)
    def _():
        h_ref[...] = jnp.zeros_like(h_ref)
        c_ref[...] = jnp.zeros_like(c_ref)

    H = h_ref.shape[-1]
    gates = xw_ref[0] + jnp.dot(h_ref[...].astype(whh_ref.dtype), whh_ref[...],
                                preferred_element_type=jnp.float32)        # (N, 4H)
    i = jax.nn.sigmoid(gates[:, 0 * H:1 * H])
    f = jax.nn.sigmoid(gates[:, 1 * H:2 * H])
    g = jnp.tanh(gates[:, 2 * H:3 * H])
    o = jax.nn.sigmoid(gates[:, 3 * H:4 * H])
    c = f * c_ref[...] + i * g
    h = o * jnp.tanh(c)
    c_ref[...] = c
    h_ref[...] = h
    ys_ref[0] = h


def lstm(xs, wih, whh, b):
    """xs: (T, N, F); wih: (F, 4H); whh: (H, 4H); b: (1, 4H)  ->  (T, N, H)."""
    T, N, F = xs.shape
    H4 = wih.shape[1]
    H = H4 // 4
    # Input projection + bias hoisted out of the serial recurrence (one big matmul).
    xw = matmul_bias(xs.reshape(T * N, F), wih, b).reshape(T, N, H4)
    return pl.pallas_call(
        _lstm_step_kernel,
        out_shape=jax.ShapeDtypeStruct((T, N, H), jnp.float32),
        grid_spec=pltpu.PrefetchScalarGridSpec(
            num_scalar_prefetch=0, grid=(T,),
            in_specs=[pl.BlockSpec((1, N, H4), lambda t: (t, 0, 0)),
                      pl.BlockSpec((H, H4), lambda t: (0, 0))],       # resident Whh
            out_specs=pl.BlockSpec((1, N, H), lambda t: (t, 0, 0)),
            scratch_shapes=[pltpu.VMEM((N, H), jnp.float32),          # h state
                            pltpu.VMEM((N, H), jnp.float32)]),        # c state
        compiler_params=pltpu.CompilerParams(
            dimension_semantics=("arbitrary",), vmem_limit_bytes=VMEM_LIMIT),
    )(xw, whh.astype(jnp.bfloat16))


# ---------------------------------------------------------------------------
# Kernel 3: BatchNorm1d(eval) over features + Linear(H -> 1), lane-dense output.
#           Activations are presented as (H, positions); output is a (1, positions)
#           row so stores are unmasked. Scalar bias lives in SMEM.
# ---------------------------------------------------------------------------
def _bn_linear_kernel(x_ref, scale_ref, shift_ref, w_ref, b_ref, o_ref):
    z = x_ref[...] * scale_ref[...] + shift_ref[...]                       # (H, tile_n)
    # TODO(synk): Dropout before linear2 is eval-mode identity.
    o_ref[...] = (jnp.dot(w_ref[...], z, preferred_element_type=jnp.float32)
                  + b_ref[0])


def bn_linear(x, bn, w, b, *, tile_n=512):
    """x: (B, L, H) -> (B, L).   w: (1, H), b: (1,)."""
    B, L, H = x.shape
    M = B * L
    scale, shift = _bn_fold(bn, (H, 1))
    zt = x.reshape(M, H).T                                  # (H, M): positions on lanes
    tile_n = min(tile_n, _round_up(M, 128))
    M_pad = _round_up(M, tile_n)
    zt = jnp.pad(zt, ((0, 0), (0, M_pad - M)))

    out = pl.pallas_call(
        _bn_linear_kernel,
        out_shape=jax.ShapeDtypeStruct((1, M_pad), jnp.float32),
        grid_spec=pltpu.PrefetchScalarGridSpec(
            num_scalar_prefetch=0, grid=(M_pad // tile_n,),
            in_specs=[pl.BlockSpec((H, tile_n), lambda i: (0, i)),
                      pl.BlockSpec((H, 1), lambda i: (0, 0)),
                      pl.BlockSpec((H, 1), lambda i: (0, 0)),
                      pl.BlockSpec((1, H), lambda i: (0, 0)),
                      pl.BlockSpec(memory_space=pltpu.MemorySpace.SMEM)],  # scalar bias
            out_specs=pl.BlockSpec((1, tile_n), lambda i: (0, i))),
        compiler_params=pltpu.CompilerParams(
            dimension_semantics=("parallel",), vmem_limit_bytes=VMEM_LIMIT),
    )(zt, scale, shift, w.reshape(1, H), b.reshape(1,))
    return out[0, :M].reshape(B, L)


# ---------------------------------------------------------------------------
# Full forward pass
# ---------------------------------------------------------------------------
def cnn_rnn2_forward(x, p):
    # conv1 -> pool1 -> bn1 -> dropout -> relu
    h = conv_pool_bn_relu(x, p["w1"], p["b1"], p["bn1"],
                          ksize=p["k1"], stride=p["s1"], pad=p["p1"], pool=2)
    # conv2 -> pool2 -> bn2 -> dropout -> relu   (conv expects channel-first input)
    h = conv_pool_bn_relu(jnp.transpose(h, (0, 2, 1)), p["w2"], p["b2"], p["bn2"],
                          ksize=p["k2"], stride=p["s2"], pad=p["p2"], pool=2)
    # permute(0,2,1) then nn.LSTM (seq-first): seq = B, "batch" = L2 (model quirk, kept)
    ys = lstm(h, p["wih"], p["whh"], p["blstm"])            # (B, L2, H)
    # permute -> bn3 -> permute -> dropout -> linear2 -> reshape(B, L2)
    return bn_linear(ys, p["bn3"], p["wlin2"], p["blin2"])


def make_params(key, *, c_in, c1, k1, s1, p1, c2, k2, s2, p2, hidden):
    keys = jax.random.split(key, 32)
    it = iter(keys)
    n = lambda shape, scale=0.1: scale * jax.random.normal(next(it), shape, jnp.float32)
    u = lambda shape: jax.random.uniform(next(it), shape, jnp.float32, 0.5, 1.5)

    def bn(c):
        return (u((c,)), n((c,)), n((c,)), u((c,)))   # gamma, beta, running_mean, running_var

    return dict(
        w1=n((c1, c_in, k1)), b1=n((c1,)), bn1=bn(c1), k1=k1, s1=s1, p1=p1,
        w2=n((c2, c1, k2)), b2=n((c2,)), bn2=bn(c2), k2=k2, s2=s2, p2=p2,
        # Gate-packed LSTM weights, columns ordered [i | f | g | o] (PyTorch order).
        wih=n((c2, 4 * hidden)), whh=n((hidden, 4 * hidden)),
        blstm=n((1, 4 * hidden)) + n((1, 4 * hidden)),    # b_ih + b_hh
        bn3=bn(hidden),
        wlin2=n((1, hidden)), blin2=n((1,)),
    )


if __name__ == "__main__":
    # Small config consistent with the module's structure (hidden=128 keeps the LSTM
    # state / gate matmuls lane-dense: 4H = 512 lanes).
    C_IN, C1, K1, S1, P1 = 4, 16, 6, 2, 1
    C2, K2, S2, P2 = 32, 3, 1, 1
    HIDDEN = 128
    B, L = 4, 130   # conv1 -> 64, pool1 -> 32, conv2 -> 32, pool2 -> 16 => output (4, 16)

    key = jax.random.PRNGKey(0)
    kx, kp = jax.random.split(key)
    x = jax.random.normal(kx, (B, C_IN, L), jnp.float32)
    params = make_params(kp, c_in=C_IN, c1=C1, k1=K1, s1=S1, p1=P1,
                         c2=C2, k2=K2, s2=S2, p2=P2, hidden=HIDDEN)

    out = jax.block_until_ready(cnn_rnn2_forward(x, params))
    assert out.shape == (B, 16), out.shape
    assert bool(jnp.all(jnp.isfinite(out)))
    print("KERNEL_OK")
</pallas_src>

<mosaic_0001>
module attributes {stable_mosaic.version = 11 : i64} {
  func.func @_conv_pool_bn_relu_kernel(%arg0: i32, %arg1: memref<128x24xbf16, #tpu.memory_space<vmem>>, %arg2: memref<128x24xbf16, #tpu.memory_space<vmem>>, %arg3: memref<24x16xbf16, #tpu.memory_space<vmem>>, %arg4: memref<1x16xf32, #tpu.memory_space<vmem>>, %arg5: memref<1x16xf32, #tpu.memory_space<vmem>>, %arg6: memref<1x16xf32, #tpu.memory_space<vmem>>, %arg7: memref<128x16xf32, #tpu.memory_space<vmem>>) attributes {dimension_semantics = [#tpu.dimension_semantics<parallel>], iteration_bounds = array<i64: 1>, scalar_prefetch = 0 : i64, scratch_operands = 0 : i64, tpu.core_type = #tpu.core_type<tc>, window_params = [{transform_indices = @transform_0, window_bounds = array<i64: 128, 24>}, {transform_indices = @transform_1, window_bounds = array<i64: 128, 24>}, {pipeline_mode = #tpu.pipeline_mode<synchronous>, transform_indices = @transform_2, window_bounds = array<i64: 24, 16>}, {pipeline_mode = #tpu.pipeline_mode<synchronous>, transform_indices = @transform_3, window_bounds = array<i64: 1, 16>}, {pipeline_mode = #tpu.pipeline_mode<synchronous>, transform_indices = @transform_4, window_bounds = array<i64: 1, 16>}, {pipeline_mode = #tpu.pipeline_mode<synchronous>, transform_indices = @transform_5, window_bounds = array<i64: 1, 16>}, {transform_indices = @transform_6, window_bounds = array<i64: 128, 16>}]} {
    %c0 = arith.constant 0 : index
    %c0_0 = arith.constant 0 : index
    %0 = vector.load %arg3[%c0, %c0_0] : memref<24x16xbf16, #tpu.memory_space<vmem>>, vector<24x16xbf16>
    %c0_1 = arith.constant 0 : index
    %c0_2 = arith.constant 0 : index
    %1 = vector.load %arg1[%c0_1, %c0_2] : memref<128x24xbf16, #tpu.memory_space<vmem>>, vector<128x24xbf16>
    %cst = arith.constant dense<0.000000e+00> : vector<128x16xf32>
    %2 = tpu.matmul %1, %0, %cst {dimension_numbers = #tpu.dot_dimension_numbers<[1], [0], [0], [1], [0, 0, 1, 1], [], []>} : vector<128x24xbf16>, vector<24x16xbf16>, vector<128x16xf32> -> vector<128x16xf32>
    %c0_3 = arith.constant 0 : index
    %c0_4 = arith.constant 0 : index
    %3 = vector.load %arg2[%c0_3, %c0_4] : memref<128x24xbf16, #tpu.memory_space<vmem>>, vector<128x24xbf16>
    %cst_5 = arith.constant dense<0.000000e+00> : vector<128x16xf32>
    %4 = tpu.matmul %3, %0, %cst_5 {dimension_numbers = #tpu.dot_dimension_numbers<[1], [0], [0], [1], [0, 0, 1, 1], [], []>} : vector<128x24xbf16>, vector<24x16xbf16>, vector<128x16xf32> -> vector<128x16xf32>
    %5 = arith.maximumf %2, %4 : vector<128x16xf32>
    %c0_6 = arith.constant 0 : index
    %c0_7 = arith.constant 0 : index
    %6 = vector.load %arg4[%c0_6, %c0_7] : memref<1x16xf32, #tpu.memory_space<vmem>>, vector<1x16xf32>
    %7 = vector.broadcast %6 : vector<1x16xf32> to vector<128x16xf32>
    %8 = arith.addf %5, %7 : vector<128x16xf32>
    %c0_8 = arith.constant 0 : index
    %c0_9 = arith.constant 0 : index
    %9 = vector.load %arg5[%c0_8, %c0_9] : memref<1x16xf32, #tpu.memory_space<vmem>>, vector<1x16xf32>
    %10 = vector.broadcast %9 : vector<1x16xf32> to vector<128x16xf32>
    %11 = arith.mulf %8, %10 : vector<128x16xf32>
    %c0_10 = arith.constant 0 : index
    %c0_11 = arith.constant 0 : index
    %12 = vector.load %arg6[%c0_10, %c0_11] : memref<1x16xf32, #tpu.memory_space<vmem>>, vector<1x16xf32>
    %13 = vector.broadcast %12 : vector<1x16xf32> to vector<128x16xf32>
    %14 = arith.addf %11, %13 : vector<128x16xf32>
    %cst_12 = arith.constant 0.000000e+00 : f32
    %15 = vector.broadcast %cst_12 : f32 to vector<128x16xf32>
    %16 = arith.maximumf %14, %15 : vector<128x16xf32>
    %c0_13 = arith.constant 0 : index
    %c0_14 = arith.constant 0 : index
    %17 = vector.load %arg7[%c0_13, %c0_14] : memref<128x16xf32, #tpu.memory_space<vmem>>, vector<128x16xf32>
    tpu.vector_store %arg7[%c0_13, %c0_14], %16 {strides = array<i32>} : memref<128x16xf32, #tpu.memory_space<vmem>>, vector<128x16xf32>,
    return
  }
  func.func @transform_0(%arg0: i32) -> (i32, i32) {
    %c0_i32 = arith.constant 0 : i32
    %c0_i32_0 = arith.constant 0 : i32
    return %arg0, %c0_i32 : i32, i32
  }
  func.func @transform_1(%arg0: i32) -> (i32, i32) {
    %c0_i32 = arith.constant 0 : i32
    %c0_i32_0 = arith.constant 0 : i32
    return %arg0, %c0_i32 : i32, i32
  }
  func.func @transform_2(%arg0: i32) -> (i32, i32) {
    %c0_i32 = arith.constant 0 : i32
    %c0_i32_0 = arith.constant 0 : i32
    %c0_i32_1 = arith.constant 0 : i32
    return %c0_i32, %c0_i32_0 : i32, i32
  }
  func.func @transform_3(%arg0: i32) -> (i32, i32) {
    %c0_i32 = arith.constant 0 : i32
    %c0_i32_0 = arith.constant 0 : i32
    %c0_i32_1 = arith.constant 0 : i32
    return %c0_i32, %c0_i32_0 : i32, i32
  }
  func.func @transform_4(%arg0: i32) -> (i32, i32) {
    %c0_i32 = arith.constant 0 : i32
    %c0_i32_0 = arith.constant 0 : i32
    %c0_i32_1 = arith.constant 0 : i32
    return %c0_i32, %c0_i32_0 : i32, i32
  }
  func.func @transform_5(%arg0: i32) -> (i32, i32) {
    %c0_i32 = arith.constant 0 : i32
    %c0_i32_0 = arith.constant 0 : i32
    %c0_i32_1 = arith.constant 0 : i32
    return %c0_i32, %c0_i32_0 : i32, i32
  }
  func.func @transform_6(%arg0: i32) -> (i32, i32) {
    %c0_i32 = arith.constant 0 : i32
    %c0_i32_0 = arith.constant 0 : i32
    return %arg0, %c0_i32 : i32, i32
  }
}

</mosaic_0001>

<llo_original>
// kernel: tpu_custom_call.1
$region0: #{tpu_custom_call.1}
  #allocation0 [shape = 'u32[]', space=smem, size = 0x4, offset = 0x4, fixed_abs, tag = 'smem constant byte address 0x4 - core index']
  #allocation1 [shape = 'u32[144,128]{1,0:T(1,128)}', space=vmem, size = 0x12000, scoped, tag = 'internal scratch']
  %s0 = inlined_call_operand.vmem [shape: bf16[128,24], index: 0, kind: input, shape index: {}]
  %s1 = inlined_call_operand.vmem [shape: bf16[128,24], index: 1, kind: input, shape index: {}]
  %s2 = inlined_call_operand.vmem [shape: bf16[24,16], index: 2, kind: input, shape index: {}]
  %s3 = inlined_call_operand.vmem [shape: f32[1,16], index: 3, kind: input, shape index: {}]
  %s4 = inlined_call_operand.vmem [shape: f32[1,16], index: 4, kind: input, shape index: {}]
  %s5 = inlined_call_operand.vmem [shape: f32[1,16], index: 5, kind: input, shape index: {}]
  %s6 = inlined_call_operand.vmem [shape: f32[128,16], index: 6, kind: output, shape index: {}]
  %s7 = sld [smem:[#allocation0]]
  $region34: #{tpu_custom_call.1} parent=0
    _
  %s9 = ssub.s32 1, %s7
  %s10 = scalar_select 0, %s9, %s7
  // Predicated region
  $region2: #{tpu_custom_call.1} parent=0 // pred_check
    _
  $region3: #{tpu_custom_call.1} parent=0 // pred_check_branch
    %12 = sbr.rel (0) target = $region5
  $region4: #{tpu_custom_call.1} parent=0 // pred_region
    _
  $region5: #{tpu_custom_call.1} parent=0 // pred_fallthru
    _
  // Predicated region
  $region6: #{tpu_custom_call.1} parent=0 // pred_check
    _
  $region7: #{tpu_custom_call.1} parent=0 // pred_check_branch
    %14 = sbr.rel (0) target = $region9
  $region8: #{tpu_custom_call.1} parent=0 // pred_region
    _
  $region9: #{tpu_custom_call.1} parent=0 // pred_fallthru
    _
  // Predicated region
  $region10: #{tpu_custom_call.1} parent=0 // pred_check
    _
  $region11: #{tpu_custom_call.1} parent=0 // pred_check_branch
    %16 = sbr.rel (0) target = $region13
  $region12: #{tpu_custom_call.1} parent=0 // pred_region
    _
  $region13: #{tpu_custom_call.1} parent=0 // pred_fallthru
    _
  // Predicated region
  $region14: #{tpu_custom_call.1} parent=0 // pred_check
    _
  $region15: #{tpu_custom_call.1} parent=0 // pred_check_branch
    %18 = sbr.rel (0) target = $region17
  $region16: #{tpu_custom_call.1} parent=0 // pred_region
    _
  $region17: #{tpu_custom_call.1} parent=0 // pred_fallthru
    _
  // Predicated region
  $region18: #{tpu_custom_call.1} parent=0 // pred_check
    _
  $region19: #{tpu_custom_call.1} parent=0 // pred_check_branch
    %20 = sbr.rel (0) target = $region21
  $region20: #{tpu_custom_call.1} parent=0 // pred_region
    _
  $region21: #{tpu_custom_call.1} parent=0 // pred_fallthru
    _
  // Predicated region
  $region22: #{tpu_custom_call.1} parent=0 // pred_check
    _
  $region23: #{tpu_custom_call.1} parent=0 // pred_check_branch
    %22 = sbr.rel (0) target = $region25
  $region24: #{tpu_custom_call.1} parent=0 // pred_region
    _
  $region25: #{tpu_custom_call.1} parent=0 // pred_fallthru
    _
  %v24 = vld [vmem:[%s2] sm:$0xf]
  %v25 = vld [vmem:[%s2 + $0x4] sm:$0xf]
  %v26 = vld [vmem:[%s2 + $0x8] sm:$0xf]
  %v27 = vld [vmem:[%s0] sm:$0xf]
  %v28 = vld [vmem:[%s0 + $0x4] sm:$0xf]
  %v29 = vld [vmem:[%s0 + $0x8] sm:$0xf]
  %v30 = vld [vmem:[%s0 + $0xc] sm:$0xf]
  %v31 = vld [vmem:[%s0 + $0x10] sm:$0xf]
  %v32 = vld [vmem:[%s0 + $0x14] sm:$0xf]
  %v33 = vld [vmem:[%s0 + $0x18] sm:$0xf]
  %v34 = vld [vmem:[%s0 + $0x1c] sm:$0xf]
  %v35 = vld [vmem:[%s0 + $0x20] sm:$0xf]
  %v36 = vld [vmem:[%s0 + $0x24] sm:$0xf]
  %v37 = vld [vmem:[%s0 + $0x28] sm:$0xf]
  %v38 = vld [vmem:[%s0 + $0x2c] sm:$0xf]
  %v39 = vld [vmem:[%s0 + $0x30] sm:$0xf]
  %v40 = vld [vmem:[%s0 + $0x34] sm:$0xf]
  %v41 = vld [vmem:[%s0 + $0x38] sm:$0xf]
  %v42 = vld [vmem:[%s0 + $0x3c] sm:$0xf]
  %v59 = vunpack.c.l.b16 %v27
  %v60 = vunpack.c.l.b16 %v28
  %v61 = vunpack.c.l.b16 %v29
  %v62 = vunpack.c.l.b16 %v30
  %v63 = vunpack.c.l.b16 %v31
  %v64 = vunpack.c.l.b16 %v32
  %v65 = vunpack.c.l.b16 %v33
  %v66 = vunpack.c.l.b16 %v34
  %v67 = vunpack.c.l.b16 %v35
  %v68 = vunpack.c.l.b16 %v36
  %v69 = vunpack.c.l.b16 %v37
  %v70 = vunpack.c.l.b16 %v38
  %v71 = vunpack.c.l.b16 %v39
  %v72 = vunpack.c.l.b16 %v40
  %v73 = vunpack.c.l.b16 %v41
  %v74 = vunpack.c.l.b16 %v42
  %v75 = vpack.c.b16 %v60, %v59
  %v76 = vpack.c.b16 %v62, %v61
  %v77 = vpack.c.b16 %v64, %v63
  %v78 = vpack.c.b16 %v66, %v65
  %v79 = vpack.c.b16 %v68, %v67
  %v80 = vpack.c.b16 %v70, %v69
  %v81 = vpack.c.b16 %v72, %v71
  %v82 = vpack.c.b16 %v74, %v73
  %v86 = vunpack.c.l.b16 %v24
  %v87 = vunpack.c.l.b16 %v25
  %v88 = vunpack.c.l.b16 %v26
  %v89 = vpack.c.b16 %v87, %v86
  %v90 = vpack.c.b16 %v88, %v88
  %vm92 = vcmask 195584
  %v94 = vsel %vm92, %v75, 0
  %v97 = vsel %vm92, %v76, 0
  %v100 = vsel %vm92, %v77, 0
  %v103 = vsel %vm92, %v78, 0
  %v106 = vsel %vm92, %v79, 0
  %v109 = vsel %vm92, %v80, 0
  %v112 = vsel %vm92, %v81, 0
  %v115 = vsel %vm92, %v82, 0
  %vm117 = vcmask 1043456
  %v119 = vsel %vm117, %v90, 0
  %121 = vmatprep.subr.bf16.mxu0 0
  %122 = vmatpush1.bf16.msra.mxu0 %v89
  %123 = vmatprep.subr.bf16.mxu0 0
  %124 = vmatpush1.bf16.msra.mxu0 %v119
  %125 = vmatprep.subr.bf16.mxu0 0
  %126 = vmatpush1.bf16.msra.mxu0 0
  %127 = vmatprep.subr.bf16.mxu0 0
  %128 = vmatpush1.bf16.msra.mxu0 0
  %129 = vmatprep.subr.bf16.mxu0 0
  %130 = vmatpush1.bf16.msra.mxu0 0
  %131 = vmatprep.subr.bf16.mxu0 0
  %132 = vmatpush1.bf16.msra.mxu0 0
  %133 = vmatprep.subr.bf16.mxu0 0
  %134 = vmatpush1.bf16.msra.mxu0 0
  %135 = vmatprep.subr.bf16.mxu0 0
  %136 = vmatpush1.bf16.msra.mxu0 0
  %137 = vmatprep.subr.bf16.mxu0 0
  %138 = vmatpush1.bf16.msra.mxu0 0
  %139 = vmatprep.subr.bf16.mxu0 0
  %140 = vmatpush1.bf16.msra.mxu0 0
  %141 = vmatprep.subr.bf16.mxu0 0
  %142 = vmatpush1.bf16.msra.mxu0 0
  %143 = vmatprep.subr.bf16.mxu0 0
  %144 = vmatpush1.bf16.msra.mxu0 0
  %145 = vmatprep.subr.bf16.mxu0 0
  %146 = vmatpush1.bf16.msra.mxu0 0
  %147 = vmatprep.subr.bf16.mxu0 0
  %148 = vmatpush1.bf16.msra.mxu0 0
  %149 = vmatprep.subr.bf16.mxu0 0
  %150 = vmatpush1.bf16.msra.mxu0 0
  %151 = vmatprep.subr.bf16.mxu0 0
  %152 = vmatpush1.bf16.msra.mxu0 0
  %153 = vmatprep.mubr.bf16.mxu0 0
  %154 = vmatmul.mubr.bf16.gmra.mrb[0].mxu0 %v94
  %v155 = vpop.f32.mrb[0].mxu0
  %v156 = vadd.f32 0.0, %v155
  %v157 = vpop.f32.mrb[0].mxu0
  %v158 = vpop.f32.mrb[0].mxu0
  %v159 = vadd.f32 0.0, %v158
  %v160 = vpop.f32.mrb[0].mxu0
  %161 = vmatprep.mubr.bf16.mxu0 0
  %162 = vmatmul.mubr.bf16.gmra.mrb[0].mxu0 %v97
  %v163 = vpop.f32.mrb[0].mxu0
  %v164 = vadd.f32 0.0, %v163
  %v165 = vpop.f32.mrb[0].mxu0
  %v166 = vpop.f32.mrb[0].mxu0
  %v167 = vadd.f32 0.0, %v166
  %v168 = vpop.f32.mrb[0].mxu0
  %169 = vmatprep.mubr.bf16.mxu0 0
  %170 = vmatmul.mubr.bf16.gmra.mrb[0].mxu0 %v100
  %v171 = vpop.f32.mrb[0].mxu0
  %v172 = vadd.f32 0.0, %v171
  %v173 = vpop.f32.mrb[0].mxu0
  %v174 = vpop.f32.mrb[0].mxu0
  %v175 = vadd.f32 0.0, %v174
  %v176 = vpop.f32.mrb[0].mxu0
  %177 = vmatprep.mubr.bf16.mxu0 0
  %178 = vmatmul.mubr.bf16.gmra.mrb[0].mxu0 %v103
  %v179 = vpop.f32.mrb[0].mxu0
  %v180 = vadd.f32 0.0, %v179
  %v181 = vpop.f32.mrb[0].mxu0
  %v182 = vpop.f32.mrb[0].mxu0
  %v183 = vadd.f32 0.0, %v182
  %v184 = vpop.f32.mrb[0].mxu0
  %185 = vmatprep.mubr.bf16.mxu0 0
  %186 = vmatmul.mubr.bf16.gmra.mrb[0].mxu0 %v106
  %v187 = vpop.f32.mrb[0].mxu0
  %v188 = vadd.f32 0.0, %v187
  %v189 = vpop.f32.mrb[0].mxu0
  %v190 = vpop.f32.mrb[0].mxu0
  %v191 = vadd.f32 0.0, %v190
  %v192 = vpop.f32.mrb[0].mxu0
  %193 = vmatprep.mubr.bf16.mxu0 0
  %194 = vmatmul.mubr.bf16.gmra.mrb[0].mxu0 %v109
  %v195 = vpop.f32.mrb[0].mxu0
  %v196 = vadd.f32 0.0, %v195
  %v197 = vpop.f32.mrb[0].mxu0
  %v198 = vpop.f32.mrb[0].mxu0
  %v199 = vadd.f32 0.0, %v198
  %v200 = vpop.f32.mrb[0].mxu0
  %201 = vmatprep.mubr.bf16.mxu0 0
  %202 = vmatmul.mubr.bf16.gmra.mrb[0].mxu0 %v112
  %v203 = vpop.f32.mrb[0].mxu0
  %v204 = vadd.f32 0.0, %v203
  %v205 = vpop.f32.mrb[0].mxu0
  %v206 = vpop.f32.mrb[0].mxu0
  %v207 = vadd.f32 0.0, %v206
  %v208 = vpop.f32.mrb[0].mxu0
  %209 = vmatprep.mubr.bf16.mxu0 0
  %210 = vmatmul.mubr.bf16.gmra.mrb[0].mxu0 %v115
  %v211 = vpop.f32.mrb[0].mxu0
  %v212 = vadd.f32 0.0, %v211
  %v213 = vpop.f32.mrb[0].mxu0
  %v214 = vpop.f32.mrb[0].mxu0
  %v215 = vadd.f32 0.0, %v214
  %v216 = vpop.f32.mrb[0].mxu0
  %217 = vdwg.mxu0
  %v218 = vld [vmem:[%s1] sm:$0xf]
  %v219 = vld [vmem:[%s1 + $0x4] sm:$0xf]
  %v220 = vld [vmem:[%s1 + $0x8] sm:$0xf]
  %v221 = vld [vmem:[%s1 + $0xc] sm:$0xf]
  %v222 = vld [vmem:[%s1 + $0x10] sm:$0xf]
  %v223 = vld [vmem:[%s1 + $0x14] sm:$0xf]
  %v224 = vld [vmem:[%s1 + $0x18] sm:$0xf]
  %v225 = vld [vmem:[%s1 + $0x1c] sm:$0xf]
  %v226 = vld [vmem:[%s1 + $0x20] sm:$0xf]
  %v227 = vld [vmem:[%s1 + $0x24] sm:$0xf]
  %v228 = vld [vmem:[%s1 + $0x28] sm:$0xf]
  %v229 = vld [vmem:[%s1 + $0x2c] sm:$0xf]
  %v230 = vld [vmem:[%s1 + $0x30] sm:$0xf]
  %v231 = vld [vmem:[%s1 + $0x34] sm:$0xf]
  %v232 = vld [vmem:[%s1 + $0x38] sm:$0xf]
  %v233 = vld [vmem:[%s1 + $0x3c] sm:$0xf]
  %v250 = vunpack.c.l.b16 %v218
  %v251 = vunpack.c.l.b16 %v219
  %v252 = vunpack.c.l.b16 %v220
  %v253 = vunpack.c.l.b16 %v221
  %v254 = vunpack.c.l.b16 %v222
  %v255 = vunpack.c.l.b16 %v223
  %v256 = vunpack.c.l.b16 %v224
  %v257 = vunpack.c.l.b16 %v225
  %v258 = vunpack.c.l.b16 %v226
  %v259 = vunpack.c.l.b16 %v227
  %v260 = vunpack.c.l.b16 %v228
  %v261 = vunpack.c.l.b16 %v229
  %v262 = vunpack.c.l.b16 %v230
  %v263 = vunpack.c.l.b16 %v231
  %v264 = vunpack.c.l.b16 %v232
  %v265 = vunpack.c.l.b16 %v233
  %v266 = vpack.c.b16 %v251, %v250
  %v267 = vpack.c.b16 %v253, %v252
  %v268 = vpack.c.b16 %v255, %v254
  %v269 = vpack.c.b16 %v257, %v256
  %v270 = vpack.c.b16 %v259, %v258
  %v271 = vpack.c.b16 %v261, %v260
  %v272 = vpack.c.b16 %v263, %v262
  %v273 = vpack.c.b16 %v265, %v264
  %v275 = vsel %vm92, %v266, 0
  %v278 = vsel %vm92, %v267, 0
  %v281 = vsel %vm92, %v268, 0
  %v284 = vsel %vm92, %v269, 0
  %v287 = vsel %vm92, %v270, 0
  %v290 = vsel %vm92, %v271, 0
  %v293 = vsel %vm92, %v272, 0
  %v296 = vsel %vm92, %v273, 0
  %298 = vmatprep.subr.bf16.mxu0 0
  %299 = vmatpush1.bf16.msra.mxu0 %v89
  %300 = vmatprep.subr.bf16.mxu0 0
  %301 = vmatpush1.bf16.msra.mxu0 %v119
  %302 = vmatprep.subr.bf16.mxu0 0
  %303 = vmatpush1.bf16.msra.mxu0 0
  %304 = vmatprep.subr.bf16.mxu0 0
  %305 = vmatpush1.bf16.msra.mxu0 0
  %306 = vmatprep.subr.bf16.mxu0 0
  %307 = vmatpush1.bf16.msra.mxu0 0
  %308 = vmatprep.subr.bf16.mxu0 0
  %309 = vmatpush1.bf16.msra.mxu0 0
  %310 = vmatprep.subr.bf16.mxu0 0
  %311 = vmatpush1.bf16.msra.mxu0 0
  %312 = vmatprep.subr.bf16.mxu0 0
  %313 = vmatpush1.bf16.msra.mxu0 0
  %314 = vmatprep.subr.bf16.mxu0 0
  %315 = vmatpush1.bf16.msra.mxu0 0
  %316 = vmatprep.subr.bf16.mxu0 0
  %317 = vmatpush1.bf16.msra.mxu0 0
  %318 = vmatprep.subr.bf16.mxu0 0
  %319 = vmatpush1.bf16.msra.mxu0 0
  %320 = vmatprep.subr.bf16.mxu0 0
  %321 = vmatpush1.bf16.msra.mxu0 0
  %322 = vmatprep.subr.bf16.mxu0 0
  %323 = vmatpush1.bf16.msra.mxu0 0
  %324 = vmatprep.subr.bf16.mxu0 0
  %325 = vmatpush1.bf16.msra.mxu0 0
  %326 = vmatprep.subr.bf16.mxu0 0
  %327 = vmatpush1.bf16.msra.mxu0 0
  %328 = vmatprep.subr.bf16.mxu0 0
  %329 = vmatpush1.bf16.msra.mxu0 0
  %330 = vmatprep.mubr.bf16.mxu0 0
  %331 = vmatmul.mubr.bf16.gmra.mrb[0].mxu0 %v275
  %v332 = vpop.f32.mrb[0].mxu0
  %v333 = vadd.f32 0.0, %v332
  %v334 = vpop.f32.mrb[0].mxu0
  %v335 = vpop.f32.mrb[0].mxu0
  %v336 = vadd.f32 0.0, %v335
  %v337 = vpop.f32.mrb[0].mxu0
  %338 = vmatprep.mubr.bf16.mxu0 0
  %339 = vmatmul.mubr.bf16.gmra.mrb[0].mxu0 %v278
  %v340 = vpop.f32.mrb[0].mxu0
  %v341 = vadd.f32 0.0, %v340
  %v342 = vpop.f32.mrb[0].mxu0
  %v343 = vpop.f32.mrb[0].mxu0
  %v344 = vadd.f32 0.0, %v343
  %v345 = vpop.f32.mrb[0].mxu0
  %346 = vmatprep.mubr.bf16.mxu0 0
  %347 = vmatmul.mubr.bf16.gmra.mrb[0].mxu0 %v281
  %v348 = vpop.f32.mrb[0].mxu0
  %v349 = vadd.f32 0.0, %v348
  %v350 = vpop.f32.mrb[0].mxu0
  %v351 = vpop.f32.mrb[0].mxu0
  %v352 = vadd.f32 0.0, %v351
  %v353 = vpop.f32.mrb[0].mxu0
  %354 = vmatprep.mubr.bf16.mxu0 0
  %355 = vmatmul.mubr.bf16.gmra.mrb[0].mxu0 %v284
  %v356 = vpop.f32.mrb[0].mxu0
  %v357 = vadd.f32 0.0, %v356
  %v358 = vpop.f32.mrb[0].mxu0
  %v359 = vpop.f32.mrb[0].mxu0
  %v360 = vadd.f32 0.0, %v359
  %v361 = vpop.f32.mrb[0].mxu0
  %362 = vmatprep.mubr.bf16.mxu0 0
  %363 = vmatmul.mubr.bf16.gmra.mrb[0].mxu0 %v287
  %v364 = vpop.f32.mrb[0].mxu0
  %v365 = vadd.f32 0.0, %v364
  %v366 = vpop.f32.mrb[0].mxu0
  %v367 = vpop.f32.mrb[0].mxu0
  %v368 = vadd.f32 0.0, %v367
  %v369 = vpop.f32.mrb[0].mxu0
  %370 = vmatprep.mubr.bf16.mxu0 0
  %371 = vmatmul.mubr.bf16.gmra.mrb[0].mxu0 %v290
  %v372 = vpop.f32.mrb[0].mxu0
  %v373 = vadd.f32 0.0, %v372
  %v374 = vpop.f32.mrb[0].mxu0
  %v375 = vpop.f32.mrb[0].mxu0
  %v376 = vadd.f32 0.0, %v375
  %v377 = vpop.f32.mrb[0].mxu0
  %378 = vmatprep.mubr.bf16.mxu0 0
  %379 = vmatmul.mubr.bf16.gmra.mrb[0].mxu0 %v293
  %v380 = vpop.f32.mrb[0].mxu0
  %v381 = vadd.f32 0.0, %v380
  %v382 = vpop.f32.mrb[0].mxu0
  %v383 = vpop.f32.mrb[0].mxu0
  %v384 = vadd.f32 0.0, %v383
  %v385 = vpop.f32.mrb[0].mxu0
  %386 = vmatprep.mubr.bf16.mxu0 0
  %387 = vmatmul.mubr.bf16.gmra.mrb[0].mxu0 %v296
  %v388 = vpop.f32.mrb[0].mxu0
  %v389 = vadd.f32 0.0, %v388
  %v390 = vpop.f32.mrb[0].mxu0
  %v391 = vpop.f32.mrb[0].mxu0
  %v392 = vadd.f32 0.0, %v391
  %v393 = vpop.f32.mrb[0].mxu0
  %394 = vdwg.mxu0
  %v395 = vmax.f32 %v156, %v333
  %v396 = vmax.f32 %v159, %v336
  %v397 = vmax.f32 %v164, %v341
  %v398 = vmax.f32 %v167, %v344
  %v399 = vmax.f32 %v172, %v349
  %v400 = vmax.f32 %v175, %v352
  %v401 = vmax.f32 %v180, %v357
  %v402 = vmax.f32 %v183, %v360
  %v403 = vmax.f32 %v188, %v365
  %v404 = vmax.f32 %v191, %v368
  %v405 = vmax.f32 %v196, %v373
  %v406 = vmax.f32 %v199, %v376
  %v407 = vmax.f32 %v204, %v381
  %v408 = vmax.f32 %v207, %v384
  %v409 = vmax.f32 %v212, %v389
  %v410 = vmax.f32 %v215, %v392
  %v411 = vld [vmem:[%s3] sm:$0x1]
  %v413 = vlaneseq
  %v414 = vshrl.u32 %v413, 7
  %v415 = vsub.s32 0, %v414
  %v416 = vrot.slane %v411, %v415
  %v418 = vadd.f32 %v395, %v416
  %v419 = vadd.f32 %v396, %v416
  %v420 = vadd.f32 %v397, %v416
  %v421 = vadd.f32 %v398, %v416
  %v422 = vadd.f32 %v399, %v416
  %v423 = vadd.f32 %v400, %v416
  %v424 = vadd.f32 %v401, %v416
  %v425 = vadd.f32 %v402, %v416
  %v426 = vadd.f32 %v403, %v416
  %v427 = vadd.f32 %v404, %v416
  %v428 = vadd.f32 %v405, %v416
  %v429 = vadd.f32 %v406, %v416
  %v430 = vadd.f32 %v407, %v416
  %v431 = vadd.f32 %v408, %v416
  %v432 = vadd.f32 %v409, %v416
  %v433 = vadd.f32 %v410, %v416
  %v434 = vld [vmem:[%s4] sm:$0x1]
  %v436 = vlaneseq
  %v437 = vshrl.u32 %v436, 7
  %v438 = vsub.s32 0, %v437
  %v439 = vrot.slane %v434, %v438
  %v441 = vmul.f32 %v418, %v439
  %v442 = vmul.f32 %v419, %v439
  %v443 = vmul.f32 %v420, %v439
  %v444 = vmul.f32 %v421, %v439
  %v445 = vmul.f32 %v422, %v439
  %v446 = vmul.f32 %v423, %v439
  %v447 = vmul.f32 %v424, %v439
  %v448 = vmul.f32 %v425, %v439
  %v449 = vmul.f32 %v426, %v439
  %v450 = vmul.f32 %v427, %v439
  %v451 = vmul.f32 %v428, %v439
  %v452 = vmul.f32 %v429, %v439
  %v453 = vmul.f32 %v430, %v439
  %v454 = vmul.f32 %v431, %v439
  %v455 = vmul.f32 %v432, %v439
  %v456 = vmul.f32 %v433, %v439
  %v457 = vld [vmem:[%s5] sm:$0x1]
  %v459 = vlaneseq
  %v460 = vshrl.u32 %v459, 7
  %v461 = vsub.s32 0, %v460
  %v462 = vrot.slane %v457, %v461
  %v464 = vadd.f32 %v441, %v462
  %v465 = vadd.f32 %v442, %v462
  %v466 = vadd.f32 %v443, %v462
  %v467 = vadd.f32 %v444, %v462
  %v468 = vadd.f32 %v445, %v462
  %v469 = vadd.f32 %v446, %v462
  %v470 = vadd.f32 %v447, %v462
  %v471 = vadd.f32 %v448, %v462
  %v472 = vadd.f32 %v449, %v462
  %v473 = vadd.f32 %v450, %v462
  %v474 = vadd.f32 %v451, %v462
  %v475 = vadd.f32 %v452, %v462
  %v476 = vadd.f32 %v453, %v462
  %v477 = vadd.f32 %v454, %v462
  %v478 = vadd.f32 %v455, %v462
  %v479 = vadd.f32 %v456, %v462
  %v480 = vmax.f32 %v464, 0.0
  %v481 = vmax.f32 %v465, 0.0
  %v482 = vmax.f32 %v466, 0.0
  %v483 = vmax.f32 %v467, 0.0
  %v484 = vmax.f32 %v468, 0.0
  %v485 = vmax.f32 %v469, 0.0
  %v486 = vmax.f32 %v470, 0.0
  %v487 = vmax.f32 %v471, 0.0
  %v488 = vmax.f32 %v472, 0.0
  %v489 = vmax.f32 %v473, 0.0
  %v490 = vmax.f32 %v474, 0.0
  %v491 = vmax.f32 %v475, 0.0
  %v492 = vmax.f32 %v476, 0.0
  %v493 = vmax.f32 %v477, 0.0
  %v494 = vmax.f32 %v478, 0.0
  %v495 = vmax.f32 %v479, 0.0
  %vm496 = vcmask 130048
  %497 = vst.msk [vmem:[%s6] sm:$0xff] %vm496, %v480
  %498 = vst.msk [vmem:[%s6 + $0x8] sm:$0xff] %vm496, %v481
  %499 = vst.msk [vmem:[%s6 + $0x10] sm:$0xff] %vm496, %v482
  %500 = vst.msk [vmem:[%s6 + $0x18] sm:$0xff] %vm496, %v483
  %501 = vst.msk [vmem:[%s6 + $0x20] sm:$0xff] %vm496, %v484
  %502 = vst.msk [vmem:[%s6 + $0x28] sm:$0xff] %vm496, %v485
  %503 = vst.msk [vmem:[%s6 + $0x30] sm:$0xff] %vm496, %v486
  %504 = vst.msk [vmem:[%s6 + $0x38] sm:$0xff] %vm496, %v487
  %505 = vst.msk [vmem:[%s6 + $0x40] sm:$0xff] %vm496, %v488
  %506 = vst.msk [vmem:[%s6 + $0x48] sm:$0xff] %vm496, %v489
  %507 = vst.msk [vmem:[%s6 + $0x50] sm:$0xff] %vm496, %v490
  %508 = vst.msk [vmem:[%s6 + $0x58] sm:$0xff] %vm496, %v491
  %509 = vst.msk [vmem:[%s6 + $0x60] sm:$0xff] %vm496, %v492
  %510 = vst.msk [vmem:[%s6 + $0x68] sm:$0xff] %vm496, %v493
  %511 = vst.msk [vmem:[%s6 + $0x70] sm:$0xff] %vm496, %v494
  %512 = vst.msk [vmem:[%s6 + $0x78] sm:$0xff] %vm496, %v495
  // Predicated region
  $region26: #{tpu_custom_call.1} parent=0 // pred_check
    _
  $region27: #{tpu_custom_call.1} parent=0 // pred_check_branch
    %514 = sbr.rel (0) target = $region29
  $region28: #{tpu_custom_call.1} parent=0 // pred_region
    _
  $region29: #{tpu_custom_call.1} parent=0 // pred_fallthru
    _
  // Predicated region
  $region30: #{tpu_custom_call.1} parent=0 // pred_check
    _
  $region31: #{tpu_custom_call.1} parent=0 // pred_check_branch
    %516 = sbr.rel (0) target = $region33
  $region32: #{tpu_custom_call.1} parent=0 // pred_region
    _
  $region33: #{tpu_custom_call.1} parent=0 // pred_fallthru
    _

</llo_original>
